<compile_context>
chip_gen: v7x
topology: tpu7x:2x2x1
jax: 0.10.0
libtpu: 0.0.40
codegen_flags: <defaults>
</compile_context>

<pallas_src>
import math

import jax
import jax.numpy as jnp
from jax.experimental import pallas as pl
from jax.experimental.pallas import tpu as pltpu


MATMUL_DTYPE = jnp.bfloat16  # MXU inputs; accumulation stays f32


# ---------------------------------------------------------------- helpers ----
def _layer_norm(x, gamma, beta, eps=1e-5):
    # torch.nn.LayerNorm over last dim (biased variance)
    mu = jnp.mean(x, axis=-1, keepdims=True)
    var = jnp.mean((x - mu) ** 2, axis=-1, keepdims=True)
    return (x - mu) * jax.lax.rsqrt(var + eps) * gamma + beta


def _gelu_exact(x):
    # torch.nn.GELU() default: 0.5 * x * (1 + erf(x / sqrt(2)))
    return 0.5 * x * (1.0 + jax.lax.erf(x * (1.0 / math.sqrt(2.0))))


def _pick_tile(n, candidates):
    """Largest candidate that evenly divides n with >=2 grid steps; else n (one block)."""
    for t in candidates:
        if t < n and n % t == 0:
            return t
    return n


_TOKEN_TILES = (512, 256, 128, 64, 32, 16, 8)
_VOCAB_TILES = (4096, 2048, 1024, 512, 256, 128)


# ------------------------------------------- kernel 1: fused Q/K/V project ---
def _qkv_kernel(x_ref, w_ref, b_ref, q_ref, k_ref, v_ref):
    x = x_ref[...].astype(MATMUL_DTYPE)                      # (TM, D)
    qkv = jnp.dot(x, w_ref[...], preferred_element_type=jnp.float32) + b_ref[...]
    d = q_ref.shape[-1]
    q_ref[...] = qkv[:, 0 * d:1 * d]
    k_ref[...] = qkv[:, 1 * d:2 * d]
    v_ref[...] = qkv[:, 2 * d:3 * d]


def _fused_qkv(x2d, wqkv, bqkv):
    n, d = x2d.shape
    tm = _pick_tile(n, _TOKEN_TILES)
    out = jax.ShapeDtypeStruct((n, d), jnp.float32)
    cost = pl.CostEstimate(
        flops=2 * n * d * 3 * d,
        transcendentals=0,
        bytes_accessed=n * d * 4 + d * 3 * d * 2 + 3 * d * 4 + 3 * n * d * 4,
    )
    return pl.pallas_call(
        _qkv_kernel,
        grid=(n // tm,),
        in_specs=[
            pl.BlockSpec((tm, d), lambda i: (i, 0)),          # activation tile streams
            pl.BlockSpec(wqkv.shape, lambda i: (0, 0)),       # weights resident
            pl.BlockSpec(bqkv.shape, lambda i: (0, 0)),
        ],
        out_specs=(
            pl.BlockSpec((tm, d), lambda i: (i, 0)),
            pl.BlockSpec((tm, d), lambda i: (i, 0)),
            pl.BlockSpec((tm, d), lambda i: (i, 0)),
        ),
        out_shape=(out, out, out),
        compiler_params=pltpu.CompilerParams(dimension_semantics=("parallel",)),
        cost_estimate=cost,
    )(x2d, wqkv, bqkv)


# -------------------------------------- kernel 2: attention per head-group ---
def _attn_kernel(m_ref, q_ref, k_ref, v_ref, o_ref):
    q = q_ref[...].astype(MATMUL_DTYPE)                      # (HP, S, dk)
    k = k_ref[...].astype(MATMUL_DTYPE)
    v = v_ref[...].astype(MATMUL_DTYPE)
    m = m_ref[...]                                           # (1, 1, S) key-padding mask
    dk = q_ref.shape[-1]
    # Q @ K^T / sqrt(d_k), batched over the heads in this group
    s = jax.lax.dot_general(q, k, (((2,), (2,)), ((0,), (0,))),
                            preferred_element_type=jnp.float32)    # (HP, S, S)
    s = s * (1.0 / math.sqrt(dk))
    s = jnp.where(m == 0.0, -1000000000.0, s)                # broadcast over heads & queries
    s = s - jnp.max(s, axis=-1, keepdims=True)
    p = jnp.exp(s)
    p = p * pl.reciprocal(jnp.sum(p, axis=-1, keepdims=True), approx=True)
    o_ref[...] = jax.lax.dot_general(p.astype(MATMUL_DTYPE), v,
                                     (((2,), (1,)), ((0,), (0,))),
                                     preferred_element_type=jnp.float32)


def _attention(qh, kh, vh, mask3, num_heads):
    bh, s, dk = qh.shape
    h = num_heads
    # heads per grid step: batch MXU work (and widen stores) but never straddle
    # a batch boundary, and keep the HP x S x S score block modest in VMEM.
    target = max(1, 256 // dk)
    hp = 1
    for cand in range(min(h, target), 0, -1):
        if h % cand == 0 and cand * s * s * 4 <= (8 << 20):
            hp = cand
            break

    spec_qkv = pl.BlockSpec((hp, s, dk), lambda i: (i, 0, 0))
    spec_m = pl.BlockSpec((1, 1, s), lambda i: ((i * hp) // h, 0, 0))
    cost = pl.CostEstimate(
        flops=4 * bh * s * s * dk,
        transcendentals=bh * s * s,
        bytes_accessed=4 * bh * s * dk * 4 + mask3.size * 4,
    )
    return pl.pallas_call(
        _attn_kernel,
        grid=(bh // hp,),
        in_specs=[spec_m, spec_qkv, spec_qkv, spec_qkv],
        out_specs=spec_qkv,
        out_shape=jax.ShapeDtypeStruct((bh, s, dk), jnp.float32),
        compiler_params=pltpu.CompilerParams(dimension_semantics=("parallel",)),
        cost_estimate=cost,
    )(mask3, qh, kh, vh)


# ---------------------- kernel 3: o_proj + LN + FFN(GELU) + LN (token-tiled) --
def _encoder_tail_kernel(x_ref, a_ref, wo_ref, bo_ref, g_ref, b_ref,
                         w1_ref, b1_ref, w2_ref, b2_ref, h_ref):
    a = a_ref[...].astype(MATMUL_DTYPE)
    mha = jnp.dot(a, wo_ref[...], preferred_element_type=jnp.float32) + bo_ref[...]
    # TODO(synk): torch.nn.Dropout(p=0.1) after o_proj is stochastic in train mode;
    # eval-mode identity here.
    g = g_ref[...]
    b = b_ref[...]
    h = _layer_norm(x_ref[...] + mha, g, b)
    ff = jnp.dot(h.astype(MATMUL_DTYPE), w1_ref[...],
                 preferred_element_type=jnp.float32) + b1_ref[...]
    ff = _gelu_exact(ff)
    ff = jnp.dot(ff.astype(MATMUL_DTYPE), w2_ref[...],
                 preferred_element_type=jnp.float32) + b2_ref[...]
    # NOTE: the reference reuses the SAME LayerNorm module (self.lay) for both
    # sublayers, so sharing gamma/beta is faithful.
    h_ref[...] = _layer_norm(h + ff, g, b)


def _encoder_tail(x2d, a2d, wo, bo, gamma, beta, w1, b1, w2, b2):
    n, d = x2d.shape
    dff = w1.shape[1]
    tm = _pick_tile(n, _TOKEN_TILES)
    tok = lambda i: (i, 0)

    def full(shape):
        return pl.BlockSpec(shape, lambda i: (0, 0))

    cost = pl.CostEstimate(
        flops=2 * n * d * d + 4 * n * d * dff,
        transcendentals=n * dff,
        bytes_accessed=(2 * n * d * 4 + d * d * 2 + 2 * d * dff * 2
                        + (4 * d + dff) * 4 + n * d * 4),
    )
    return pl.pallas_call(
        _encoder_tail_kernel,
        grid=(n // tm,),
        in_specs=[
            pl.BlockSpec((tm, d), tok),                      # x residual tile
            pl.BlockSpec((tm, d), tok),                      # attention output tile
            full(wo.shape), full(bo.shape), full(gamma.shape), full(beta.shape),
            full(w1.shape), full(b1.shape), full(w2.shape), full(b2.shape),
        ],
        out_specs=pl.BlockSpec((tm, d), tok),
        out_shape=jax.ShapeDtypeStruct((n, d), jnp.float32),
        compiler_params=pltpu.CompilerParams(dimension_semantics=("parallel",)),
        cost_estimate=cost,
    )(x2d, a2d, wo, bo, gamma, beta, w1, b1, w2, b2)


# -------------------- kernel 4: classification head, (token, vocab) tiled ----
def _cls_kernel(h_ref, w_ref, b_ref, o_ref):
    o_ref[...] = (jnp.dot(h_ref[...].astype(MATMUL_DTYPE), w_ref[...],
                          preferred_element_type=jnp.float32) + b_ref[...])


def _cls_head(h2d, wc, bc):
    n, d = h2d.shape
    v = wc.shape[1]
    tm = _pick_tile(n, _TOKEN_TILES)
    tv = _pick_tile(v, _VOCAB_TILES)
    cost = pl.CostEstimate(
        flops=2 * n * d * v,
        transcendentals=0,
        bytes_accessed=n * d * 4 * (v // tv) + d * v * 2 + v * 4 + n * v * 4,
    )
    return pl.pallas_call(
        _cls_kernel,
        grid=(n // tm, v // tv),
        in_specs=[
            pl.BlockSpec((tm, d), lambda i, j: (i, 0)),
            pl.BlockSpec((d, tv), lambda i, j: (0, j)),
            pl.BlockSpec((1, tv), lambda i, j: (0, j)),
        ],
        out_specs=pl.BlockSpec((tm, tv), lambda i, j: (i, j)),
        out_shape=jax.ShapeDtypeStruct((n, v), jnp.float32),
        compiler_params=pltpu.CompilerParams(
            dimension_semantics=("parallel", "parallel")),
        cost_estimate=cost,
    )(h2d, wc, bc)


# ------------------------------------------------------------- full model ----
def init_params(key, vocab_size, d_model, num_heads):
    dff = 4 * d_model
    ks = jax.random.split(key, 20)

    def w(k, shape, scale=0.02):
        return scale * jax.random.normal(k, shape, dtype=jnp.float32)

    return dict(
        num_heads=num_heads,
        tok_emb=w(ks[0], (vocab_size, d_model)),
        seg_emb=w(ks[1], (2, d_model)),
        pos_emb=w(ks[2], (100, d_model)),
        # Linear weights stored as (in, out) = torch_weight.T; y = x @ W + b
        wq=w(ks[3], (d_model, d_model)), bq=w(ks[4], (1, d_model), 0.01),
        wk=w(ks[5], (d_model, d_model)), bk=w(ks[6], (1, d_model), 0.01),
        wv=w(ks[7], (d_model, d_model)), bv=w(ks[8], (1, d_model), 0.01),
        wo=w(ks[9], (d_model, d_model)), bo=w(ks[10], (1, d_model), 0.01),
        gamma=jnp.ones((1, d_model), jnp.float32),
        beta=jnp.zeros((1, d_model), jnp.float32),
        w1=w(ks[11], (d_model, dff)), b1=w(ks[12], (1, dff), 0.01),
        w2=w(ks[13], (dff, d_model)), b2=w(ks[14], (1, d_model), 0.01),
        cls_w=w(ks[15], (d_model, vocab_size)), cls_b=w(ks[16], (1, vocab_size), 0.01),
    )


def bert_forward(params, token_ids, seq_ids, pos_ids, atten_mask=None):
    B, S = token_ids.shape
    D = params["tok_emb"].shape[1]
    H = params["num_heads"]
    dk = D // H
    V = params["cls_w"].shape[1]

    # embedding gathers + sum (plain-JAX glue)
    tok = jnp.take(params["tok_emb"], token_ids, axis=0)
    seg = jnp.take(params["seg_emb"], seq_ids, axis=0)
    pos = jnp.take(params["pos_emb"], pos_ids, axis=0)
    x2d = (tok + seg + pos).astype(jnp.float32).reshape(B * S, D)

    # fused Q/K/V: one (D, 3D) weight, streamed token tiles
    wqkv = jnp.concatenate([params["wq"], params["wk"], params["wv"]],
                           axis=1).astype(MATMUL_DTYPE)
    bqkv = jnp.concatenate([params["bq"], params["bk"], params["bv"]], axis=1)
    q2d, k2d, v2d = _fused_qkv(x2d, wqkv, bqkv)

    # torch: Q.view(B, H, S, d_k) on the contiguous (B, S, D) tensor — a flat
    # reinterpretation, so these reshapes are copy-free.
    qh = q2d.reshape(B * H, S, dk)
    kh = k2d.reshape(B * H, S, dk)
    vh = v2d.reshape(B * H, S, dk)

    # key-padding mask kept as (B, 1, S); broadcast over heads/queries in-kernel
    if atten_mask is None:
        mask3 = jnp.ones((B, 1, S), jnp.float32)
    else:
        # TODO(synk): only key-padding masks ((B,1,1,S) / (B,S)) are supported;
        # a full (B,1,S,S) mask would need a per-query mask BlockSpec.
        mask3 = atten_mask.astype(jnp.float32).reshape(B, 1, S)

    attn = _attention(qh, kh, vh, mask3, H)                  # (B*H, S, dk)
    a2d = attn.reshape(B * S, D)                              # torch .contiguous().view

    h2d = _encoder_tail(
        x2d, a2d,
        params["wo"].astype(MATMUL_DTYPE), params["bo"],
        params["gamma"], params["beta"],
        params["w1"].astype(MATMUL_DTYPE), params["b1"],
        params["w2"].astype(MATMUL_DTYPE), params["b2"])

    logits2d = _cls_head(h2d, params["cls_w"].astype(MATMUL_DTYPE), params["cls_b"])
    return logits2d.reshape(B, S, V)


if __name__ == "__main__":
    vocab_size, d_model, seq_len, num_heads = 64, 32, 8, 4
    B = 2

    key = jax.random.PRNGKey(0)
    pkey, dkey = jax.random.split(key)
    params = init_params(pkey, vocab_size, d_model, num_heads)

    k1, _ = jax.random.split(dkey)
    token_ids = jax.random.randint(k1, (B, seq_len), 0, vocab_size, dtype=jnp.int32)
    seq_ids = jnp.concatenate(
        [jnp.zeros((B, seq_len // 2), jnp.int32),
         jnp.ones((B, seq_len - seq_len // 2), jnp.int32)], axis=1)
    pos_ids = jnp.broadcast_to(jnp.arange(seq_len, dtype=jnp.int32)[None, :], (B, seq_len))

    # padding-style attention mask: batch 1 ignores the last 2 key positions
    atten_mask = jnp.ones((B, 1, 1, seq_len), jnp.float32)
    atten_mask = atten_mask.at[1, :, :, -2:].set(0.0)

    out = bert_forward(params, token_ids, seq_ids, pos_ids, atten_mask)
    jax.block_until_ready(out)
    assert out.shape == (B, seq_len, vocab_size) and out.dtype == jnp.float32
    assert bool(jnp.all(jnp.isfinite(out)))
    print("KERNEL_OK")
</pallas_src>

<mosaic_0001>
module attributes {stable_mosaic.version = 11 : i64} {
  func.func @_qkv_kernel(%arg0: i32, %arg1: memref<8x32xf32, #tpu.memory_space<vmem>>, %arg2: memref<32x96xbf16, #tpu.memory_space<vmem>>, %arg3: memref<1x96xf32, #tpu.memory_space<vmem>>, %arg4: memref<8x32xf32, #tpu.memory_space<vmem>>, %arg5: memref<8x32xf32, #tpu.memory_space<vmem>>, %arg6: memref<8x32xf32, #tpu.memory_space<vmem>>) attributes {dimension_semantics = [#tpu.dimension_semantics<parallel>], iteration_bounds = array<i64: 2>, scalar_prefetch = 0 : i64, scratch_operands = 0 : i64, tpu.core_type = #tpu.core_type<tc>, window_params = [{transform_indices = @transform_0, window_bounds = array<i64: 8, 32>}, {pipeline_mode = #tpu.pipeline_mode<synchronous>, transform_indices = @transform_1, window_bounds = array<i64: 32, 96>}, {pipeline_mode = #tpu.pipeline_mode<synchronous>, transform_indices = @transform_2, window_bounds = array<i64: 1, 96>}, {transform_indices = @transform_3, window_bounds = array<i64: 8, 32>}, {transform_indices = @transform_4, window_bounds = array<i64: 8, 32>}, {transform_indices = @transform_5, window_bounds = array<i64: 8, 32>}]} {
    %c0 = arith.constant 0 : index
    %c0_0 = arith.constant 0 : index
    %0 = vector.load %arg1[%c0, %c0_0] : memref<8x32xf32, #tpu.memory_space<vmem>>, vector<8x32xf32>
    %1 = arith.truncf %0 : vector<8x32xf32> to vector<8x32xbf16>
    %c0_1 = arith.constant 0 : index
    %c0_2 = arith.constant 0 : index
    %2 = vector.load %arg2[%c0_1, %c0_2] : memref<32x96xbf16, #tpu.memory_space<vmem>>, vector<32x96xbf16>
    %cst = arith.constant dense<0.000000e+00> : vector<8x96xf32>
    %3 = tpu.matmul %1, %2, %cst {dimension_numbers = #tpu.dot_dimension_numbers<[1], [0], [0], [1], [0, 0, 1, 1], [], []>} : vector<8x32xbf16>, vector<32x96xbf16>, vector<8x96xf32> -> vector<8x96xf32>
    %c0_3 = arith.constant 0 : index
    %c0_4 = arith.constant 0 : index
    %4 = vector.load %arg3[%c0_3, %c0_4] : memref<1x96xf32, #tpu.memory_space<vmem>>, vector<1x96xf32>
    %5 = vector.broadcast %4 : vector<1x96xf32> to vector<8x96xf32>
    %6 = arith.addf %3, %5 : vector<8x96xf32>
    %7 = vector.extract_strided_slice %6 {offsets = [0, 0], sizes = [8, 32], strides = [1, 1]} : vector<8x96xf32> to vector<8x32xf32>
    %c0_5 = arith.constant 0 : index
    %c0_6 = arith.constant 0 : index
    %8 = vector.load %arg4[%c0_5, %c0_6] : memref<8x32xf32, #tpu.memory_space<vmem>>, vector<8x32xf32>
    tpu.vector_store %arg4[%c0_5, %c0_6], %7 {strides = array<i32>} : memref<8x32xf32, #tpu.memory_space<vmem>>, vector<8x32xf32>,
    %9 = vector.extract_strided_slice %6 {offsets = [0, 32], sizes = [8, 32], strides = [1, 1]} : vector<8x96xf32> to vector<8x32xf32>
    %c0_7 = arith.constant 0 : index
    %c0_8 = arith.constant 0 : index
    %10 = vector.load %arg5[%c0_7, %c0_8] : memref<8x32xf32, #tpu.memory_space<vmem>>, vector<8x32xf32>
    tpu.vector_store %arg5[%c0_7, %c0_8], %9 {strides = array<i32>} : memref<8x32xf32, #tpu.memory_space<vmem>>, vector<8x32xf32>,
    %11 = vector.extract_strided_slice %6 {offsets = [0, 64], sizes = [8, 32], strides = [1, 1]} : vector<8x96xf32> to vector<8x32xf32>
    %c0_9 = arith.constant 0 : index
    %c0_10 = arith.constant 0 : index
    %12 = vector.load %arg6[%c0_9, %c0_10] : memref<8x32xf32, #tpu.memory_space<vmem>>, vector<8x32xf32>
    tpu.vector_store %arg6[%c0_9, %c0_10], %11 {strides = array<i32>} : memref<8x32xf32, #tpu.memory_space<vmem>>, vector<8x32xf32>,
    return
  }
  func.func @transform_0(%arg0: i32) -> (i32, i32) {
    %c0_i32 = arith.constant 0 : i32
    %c0_i32_0 = arith.constant 0 : i32
    return %arg0, %c0_i32 : i32, i32
  }
  func.func @transform_1(%arg0: i32) -> (i32, i32) {
    %c0_i32 = arith.constant 0 : i32
    %c0_i32_0 = arith.constant 0 : i32
    %c0_i32_1 = arith.constant 0 : i32
    return %c0_i32, %c0_i32_0 : i32, i32
  }
  func.func @transform_2(%arg0: i32) -> (i32, i32) {
    %c0_i32 = arith.constant 0 : i32
    %c0_i32_0 = arith.constant 0 : i32
    %c0_i32_1 = arith.constant 0 : i32
    return %c0_i32, %c0_i32_0 : i32, i32
  }
  func.func @transform_3(%arg0: i32) -> (i32, i32) {
    %c0_i32 = arith.constant 0 : i32
    %c0_i32_0 = arith.constant 0 : i32
    return %arg0, %c0_i32 : i32, i32
  }
  func.func @transform_4(%arg0: i32) -> (i32, i32) {
    %c0_i32 = arith.constant 0 : i32
    %c0_i32_0 = arith.constant 0 : i32
    return %arg0, %c0_i32 : i32, i32
  }
  func.func @transform_5(%arg0: i32) -> (i32, i32) {
    %c0_i32 = arith.constant 0 : i32
    %c0_i32_0 = arith.constant 0 : i32
    return %arg0, %c0_i32 : i32, i32
  }
}

</mosaic_0001>

<llo_original>
// kernel: tpu_custom_call.1
$region0: #{tpu_custom_call.1}
  #allocation0 [shape = 'u32[]', space=smem, size = 0x4, offset = 0x4, fixed_abs, tag = 'smem constant byte address 0x4 - core index']
  #allocation1 [shape = 'u32[144,128]{1,0:T(1,128)}', space=vmem, size = 0x12000, scoped, tag = 'internal scratch']
  %s0 = inlined_call_operand.hbm [shape: f32[16,32], index: 0, kind: input, shape index: {}]
  %s1 = inlined_call_operand.hbm [shape: bf16[32,96], index: 1, kind: input, shape index: {}]
  %s2 = inlined_call_operand.vmem [shape: f32[1,96], index: 2, kind: input, shape index: {}]
  %s3 = inlined_call_operand.hbm [shape: f32[16,32], index: 3, kind: output, shape index: {0}]
  %s4 = inlined_call_operand.hbm [shape: f32[16,32], index: 4, kind: output, shape index: {1}]
  %s5 = inlined_call_operand.hbm [shape: f32[16,32], index: 5, kind: output, shape index: {2}]
  %6 = xla_tuple %s3, %s4, %s5
  %s7 = sld [smem:[#allocation0]]
  $region69: #{tpu_custom_call.1} parent=0
    _
  %s9 = ssub.s32 1, %s7
  %s10 = scalar_select 0, %s9, %s7
  $region1: #{tpu_custom_call.1} parent=0
    #allocation2 [shape = 'u8[8192]{0}', space=vmem, size = 0x2000, scoped, tag = 'input window, operand 0']
    #allocation3 [shape = 's32[2]{0}', space=sflag, size = 0x8, scoped, tag = 'scoped memory for tpu_custom_call.1']
    #allocation4 [shape = 's32[2]{0}', space=sflag, size = 0x8, scoped, tag = 'scoped memory for tpu_custom_call.1']
    #allocation5 [shape = 'u8[8192]{0}', space=vmem, size = 0x2000, scoped, tag = 'input window, operand 1, single buffered']
    #allocation6 [shape = 's32[1]{0}', space=sflag, size = 0x4, scoped, tag = 'scoped memory for tpu_custom_call.1']
    #allocation7 [shape = 'u8[8192]{0}', space=vmem, size = 0x2000, scoped, tag = 'output window, operand 0']
    #allocation8 [shape = 'u8[8192]{0}', space=vmem, size = 0x2000, scoped, tag = 'output window, operand 1']
    #allocation9 [shape = 's32[2]{0}', space=sflag, size = 0x8, scoped, tag = 'scoped memory for tpu_custom_call.1']
    #allocation10 [shape = 'u8[8192]{0}', space=vmem, size = 0x2000, scoped, tag = 'output window, operand 2']
    %11 = vsyncpa [#allocation3], 0
    %s12 = scalar_lea.sflag [#allocation3], 1
    %13 = vsyncpa %s12, 0
    %14 = vsyncpa [#allocation6], 0
    %15 = vsyncpa [#allocation4], 0
    %s16 = scalar_lea.sflag [#allocation4], 1
    %17 = vsyncpa %s16, 0
    %18 = vsyncpa [#allocation9], 0
    %s19 = scalar_lea.sflag [#allocation9], 1
    %20 = vsyncpa %s19, 0
    loop: start=0, step=1, limit=4
    $region2: #{tpu_custom_call.1} parent=1 // loop_pre_header
      _
    $region3: #{tpu_custom_call.1} parent=1 // loop_header
      %s22 = sphi 0, %s26
      %p23 = scmp.ge.s32.totalorder %s22, 4
      %s32 = sphi 0, %s34
      %s35 = sphi 0, %s32
      %s36 = sphi 0, %s35
      %s52 = sphi 0, %s36
      %s56 = sphi 0, %s56
      %s58 = sphi 0, %s56
      %s59 = sphi 0, %s58
      %s73 = sphi 0, %s59
      %s77 = sphi 0, %s77
      %s79 = sphi 0, %s77
      %s80 = sphi 0, %s79
      %s94 = sphi 0, %s80
      %s100 = sphi 0, %s102
      %s103 = sphi 0, %s100
      %s104 = sphi 0, %s103
      %s120 = sphi 0, %s104
      %s126 = sphi 0, %s128
      %s129 = sphi 0, %s126
      %s130 = sphi 0, %s129
      %s146 = sphi 0, %s130
      %s152 = sphi 0, %s154
      %s155 = sphi 0, %s152
      %s156 = sphi 0, %s155
      %s172 = sphi 0, %s156
    $region4: #{tpu_custom_call.1} parent=1 // loop_header_branch
      %25 = sbr.rel (%p23) target = $region8
    $region5: #{tpu_custom_call.1} parent=1 // loop_body
      %s27 = ssub.s32 %s22, 1
      %s28 = ssub.s32 %s22, 2
      %s29 = sadd.s32 %s22, 1
      %s30 = ssub.s32 %s22, %s29
      %p31 = scmp.eq.s32.totalorder %s30, 0
      %s33 = sadd.s32 %s32, 1
      %s34 = scalar_select %p31, %s32, %s33
      %p37 = pneg %p31
      %p38 = scmp.eq.s32.totalorder %s22, 1
      %p39 = por %p37, %p38
      %p40 = scmp.ne.s32.totalorder %s32, %s35
      %p41 = scmp.eq.s32.totalorder %s22, 0
      %p42 = por %p40, %p41
      %p43 = scmp.ne.s32.totalorder %s32, %s35
      %p44 = scmp.eq.s32.totalorder %s27, 1
      %p45 = por %p43, %p44
      %p46 = scmp.ne.s32.totalorder %s35, %s36
      %p47 = scmp.eq.s32.totalorder %s27, 0
      %p48 = por %p46, %p47
      %p49 = scmp.ne.s32.totalorder %s35, %s36
      %p50 = scmp.eq.s32.totalorder %s28, 1
      %p51 = por %p49, %p50
      %p53 = scmp.ne.s32.totalorder %s36, %s52
      %p54 = scmp.eq.s32.totalorder %s28, 0
      %p55 = por %p53, %p54
      %s57 = sadd.s32 %s56, 1
      %p60 = scmp.eq.s32.totalorder %s22, 1
      %p61 = scmp.ne.s32.totalorder %s56, %s58
      %p62 = scmp.eq.s32.totalorder %s22, 0
      %p63 = por %p61, %p62
      %p64 = scmp.ne.s32.totalorder %s56, %s58
      %p65 = scmp.eq.s32.totalorder %s27, 1
      %p66 = por %p64, %p65
      %p67 = scmp.ne.s32.totalorder %s58, %s59
      %p68 = scmp.eq.s32.totalorder %s27, 0
      %p69 = por %p67, %p68
      %p70 = scmp.ne.s32.totalorder %s58, %s59
      %p71 = scmp.eq.s32.totalorder %s28, 1
      %p72 = por %p70, %p71
      %p74 = scmp.ne.s32.totalorder %s59, %s73
      %p75 = scmp.eq.s32.totalorder %s28, 0
      %p76 = por %p74, %p75
      %s78 = sadd.s32 %s77, 1
      %p81 = scmp.eq.s32.totalorder %s22, 1
      %p82 = scmp.ne.s32.totalorder %s77, %s79
      %p83 = scmp.eq.s32.totalorder %s22, 0
      %p84 = por %p82, %p83
      %p85 = scmp.ne.s32.totalorder %s77, %s79
      %p86 = scmp.eq.s32.totalorder %s27, 1
      %p87 = por %p85, %p86
      %p88 = scmp.ne.s32.totalorder %s79, %s80
      %p89 = scmp.eq.s32.totalorder %s27, 0
      %p90 = por %p88, %p89
      %p91 = scmp.ne.s32.totalorder %s79, %s80
      %p92 = scmp.eq.s32.totalorder %s28, 1
      %p93 = por %p91, %p92
      %p95 = scmp.ne.s32.totalorder %s80, %s94
      %p96 = scmp.eq.s32.totalorder %s28, 0
      %p97 = por %p95, %p96
      %s98 = ssub.s32 %s22, %s29
      %p99 = scmp.eq.s32.totalorder %s98, 0
      %s101 = sadd.s32 %s100, 1
      %s102 = scalar_select %p99, %s100, %s101
      %p105 = pneg %p99
      %p106 = scmp.eq.s32.totalorder %s22, 1
      %p107 = por %p105, %p106
      %p108 = scmp.ne.s32.totalorder %s100, %s103
      %p109 = scmp.eq.s32.totalorder %s22, 0
      %p110 = por %p108, %p109
      %p111 = scmp.ne.s32.totalorder %s100, %s103
      %p112 = scmp.eq.s32.totalorder %s27, 1
      %p113 = por %p111, %p112
      %p114 = scmp.ne.s32.totalorder %s103, %s104
      %p115 = scmp.eq.s32.totalorder %s27, 0
      %p116 = por %p114, %p115
      %p117 = scmp.ne.s32.totalorder %s103, %s104
      %p118 = scmp.eq.s32.totalorder %s28, 1
      %p119 = por %p117, %p118
      %p121 = scmp.ne.s32.totalorder %s104, %s120
      %p122 = scmp.eq.s32.totalorder %s28, 0
      %p123 = por %p121, %p122
      %s124 = ssub.s32 %s22, %s29
      %p125 = scmp.eq.s32.totalorder %s124, 0
      %s127 = sadd.s32 %s126, 1
      %s128 = scalar_select %p125, %s126, %s127
      %p131 = pneg %p125
      %p132 = scmp.eq.s32.totalorder %s22, 1
      %p133 = por %p131, %p132
      %p134 = scmp.ne.s32.totalorder %s126, %s129
      %p135 = scmp.eq.s32.totalorder %s22, 0
      %p136 = por %p134, %p135
      %p137 = scmp.ne.s32.totalorder %s126, %s129
      %p138 = scmp.eq.s32.totalorder %s27, 1
      %p139 = por %p137, %p138
      %p140 = scmp.ne.s32.totalorder %s129, %s130
      %p141 = scmp.eq.s32.totalorder %s27, 0
      %p142 = por %p140, %p141
      %p143 = scmp.ne.s32.totalorder %s129, %s130
      %p144 = scmp.eq.s32.totalorder %s28, 1
      %p145 = por %p143, %p144
      %p147 = scmp.ne.s32.totalorder %s130, %s146
      %p148 = scmp.eq.s32.totalorder %s28, 0
      %p149 = por %p147, %p148
      %s150 = ssub.s32 %s22, %s29
      %p151 = scmp.eq.s32.totalorder %s150, 0
      %s153 = sadd.s32 %s152, 1
      %s154 = scalar_select %p151, %s152, %s153
      %p157 = pneg %p151
      %p158 = scmp.eq.s32.totalorder %s22, 1
      %p159 = por %p157, %p158
      %p160 = scmp.ne.s32.totalorder %s152, %s155
      %p161 = scmp.eq.s32.totalorder %s22, 0
      %p162 = por %p160, %p161
      %p163 = scmp.ne.s32.totalorder %s152, %s155
      %p164 = scmp.eq.s32.totalorder %s27, 1
      %p165 = por %p163, %p164
      %p166 = scmp.ne.s32.totalorder %s155, %s156
      %p167 = scmp.eq.s32.totalorder %s27, 0
      %p168 = por %p166, %p167
      %p169 = scmp.ne.s32.totalorder %s155, %s156
      %p170 = scmp.eq.s32.totalorder %s28, 1
      %p171 = por %p169, %p170
      %p173 = scmp.ne.s32.totalorder %s156, %s172
      %p174 = scmp.eq.s32.totalorder %s28, 0
      %p175 = por %p173, %p174
      %p176 = scmp.le.s32.totalorder 1, %s22
      %p177 = scmp.lt.s32.totalorder %s22, 3
      %p178 = pnand %p176, %p177
      %p179 = pneg %p178
      // Predicated region
      $region9: #{tpu_custom_call.1} parent=5 // pred_check
        _
      $region10: #{tpu_custom_call.1} parent=5 // pred_check_branch
        %181 = sbr.rel (%p178) target = $region12
      $region11: #{tpu_custom_call.1} parent=5 // pred_region
        %s182 = ssub.s32 %s22, 1
        // Predicated region
        $region13: #{tpu_custom_call.1} parent=11 // pred_check
          %p183 = pneg %p69
        $region14: #{tpu_custom_call.1} parent=11 // pred_check_branch
          %185 = sbr.rel (%p183) target = $region16
        $region15: #{tpu_custom_call.1} parent=11 // pred_region
          %s187 = ssub.s32 256, 256
          %188 = vsyncadd [#allocation6], %s187
          %s189 = sshll.u32 [#allocation5], 4
          %s190 = int_to_ptr.vmem [resolvable:$true] %s189
          %195 = dma.hbm_to_vmem [thread:$0]  %s1, 256, %s190, [#allocation6], 64, 64, 4
        $region16: #{tpu_custom_call.1} parent=11 // pred_fallthru
          _
        // Predicated region
        $region17: #{tpu_custom_call.1} parent=11 // pred_check
          %p196 = pneg %p90
        $region18: #{tpu_custom_call.1} parent=11 // pred_check_branch
          %198 = sbr.rel (%p196) target = $region20
        $region19: #{tpu_custom_call.1} parent=11 // pred_region
          _
        $region20: #{tpu_custom_call.1} parent=11 // pred_fallthru
          _
      $region12: #{tpu_custom_call.1} parent=5 // pred_fallthru
        _
      %p199 = scmp.lt.s32.totalorder %s22, 2
      // Predicated region
      $region21: #{tpu_custom_call.1} parent=5 // pred_check
        %p200 = pneg %p199
      $region22: #{tpu_custom_call.1} parent=5 // pred_check_branch
        %202 = sbr.rel (%p200) target = $region24
      $region23: #{tpu_custom_call.1} parent=5 // pred_region
        // Predicated region
        $region25: #{tpu_custom_call.1} parent=23 // pred_check
          %p203 = pneg %p42
        $region26: #{tpu_custom_call.1} parent=23 // pred_check_branch
          %205 = sbr.rel (%p203) target = $region28
        $region27: #{tpu_custom_call.1} parent=23 // pred_region
          %s206 = sand.u32 %s32, 1
          %s207 = scalar_lea.sflag [#allocation3], %s206
          %s208 = sand.u32 %s32, 1
          %s209 = smul.addr %s208, 8
          %s210 = scalar_lea.vmem [#allocation2], %s209
          %s212 = ssub.s32 128, 128
          %213 = vsyncadd %s207, %s212
          %s214 = smul.addr %s22, 128
          %s215 = scalar_lea.hbm %s0, %s214
          %s217 = sshll.u32 %s210, 4
          %s218 = int_to_ptr.vmem [resolvable:$true] %s217
          %220 = dma.hbm_to_vmem [thread:$0]  %s215, 128, %s218, %s207
        $region28: #{tpu_custom_call.1} parent=23 // pred_fallthru
          _
      $region24: #{tpu_custom_call.1} parent=5 // pred_fallthru
        _
      %p221 = scmp.le.s32.totalorder 1, %s22
      %p222 = scmp.lt.s32.totalorder %s22, 3
      %p223 = pnand %p221, %p222
      %p224 = pneg %p223
      // Predicated region
      $region29: #{tpu_custom_call.1} parent=5 // pred_check
        _
      $region30: #{tpu_custom_call.1} parent=5 // pred_check_branch
        %226 = sbr.rel (%p223) target = $region32
      $region31: #{tpu_custom_call.1} parent=5 // pred_region
        %s227 = ssub.s32 %s22, 1
        %s228 = sand.u32 %s35, 1
        %s229 = scalar_lea.sflag [#allocation3], %s228
        %s230 = sand.u32 %s35, 1
        %s231 = smul.addr %s230, 8
        %s232 = scalar_lea.vmem [#allocation2], %s231
        // Predicated region
        $region33: #{tpu_custom_call.1} parent=31 // pred_check
          %p233 = pneg %p48
        $region34: #{tpu_custom_call.1} parent=31 // pred_check_branch
          %235 = sbr.rel (%p233) target = $region36
        $region35: #{tpu_custom_call.1} parent=31 // pred_region
          %236 = dma.done %s229, 128
        $region36: #{tpu_custom_call.1} parent=31 // pred_fallthru
          _
        // Predicated region
        $region37: #{tpu_custom_call.1} parent=31 // pred_check
          %p237 = pneg %p69
        $region38: #{tpu_custom_call.1} parent=31 // pred_check_branch
          %239 = sbr.rel (%p237) target = $region40
        $region39: #{tpu_custom_call.1} parent=31 // pred_region
          %240 = dma.done [#allocation6], 256
        $region40: #{tpu_custom_call.1} parent=31 // pred_fallthru
          _
        %s241 = sand.u32 %s35, 1
        %s242 = scalar_lea.sflag [#allocation3], %s241
        %s243 = sand.u32 %s35, 1
        %s244 = smul.addr %s243, 8
        %s245 = scalar_lea.vmem [#allocation2], %s244
        %p246 = pneg %p48
        %p247 = pneg %p45
        %p248 = pneg %p69
        %p249 = pneg %p66
        %p250 = pneg %p90
        %p251 = pneg %p87
        %p252 = pneg %p116
        %p253 = pneg %p113
        %s254 = sand.u32 %s103, 1
        %s255 = scalar_lea.sflag [#allocation4], %s254
        %s256 = sand.u32 %s103, 1
        %s257 = smul.addr %s256, 8
        %s258 = scalar_lea.vmem [#allocation7], %s257
        %p259 = pneg %p142
        %p260 = pneg %p139
        %s261 = sand.u32 %s27, 1
        %s262 = scalar_lea.sflag [#allocation9], %s261
        %s263 = sand.u32 %s129, 1
        %s264 = smul.addr %s263, 8
        %s265 = scalar_lea.vmem [#allocation8], %s264
        %p266 = pneg %p168
        %p267 = pneg %p165
        %s268 = sand.u32 %s27, 1
        %s269 = scalar_lea.sflag [#allocation9], %s268
        %s270 = sand.u32 %s155, 1
        %s271 = smul.addr %s270, 8
        %s272 = scalar_lea.vmem [#allocation10], %s271
        %v274 = vld [vmem:[%s232] sm:$0xff]
        %v275 = vpack.c.bf16 %v274, %v274
        %v276 = vld [vmem:[#allocation5] sm:$0xf]
        %v277 = vld [vmem:[#allocation5 + $0x4] sm:$0xf]
        %v278 = vld [vmem:[#allocation5 + $0x8] sm:$0xf]
        %v279 = vld [vmem:[#allocation5 + $0xc] sm:$0xf]
        %v280 = vld [vmem:[%s2] sm:$0x1]
        %v282 = vlaneseq
        %v283 = vshrl.u32 %v282, 7
        %v284 = vsub.s32 0, %v283
        %v285 = vrot.slane %v280, %v284
        %v291 = vunpack.c.l.b16 %v276
        %v292 = vunpack.c.l.b16 %v277
        %v293 = vunpack.c.l.b16 %v278
        %v294 = vunpack.c.l.b16 %v279
        %v295 = vpack.c.b16 %v292, %v291
        %v296 = vpack.c.b16 %v294, %v293
        %vm299 = vcmask 261120
        %v301 = vsel %vm299, %v275, 0
        %303 = vmatprep.subr.bf16.mxu0 0
        %304 = vmatpush1.bf16.msra.mxu0 %v295
        %305 = vmatprep.subr.bf16.mxu0 0
        %306 = vmatpush1.bf16.msra.mxu0 %v296
        %307 = vmatprep.subr.bf16.mxu0 0
        %308 = vmatpush1.bf16.msra.mxu0 0
        %309 = vmatprep.subr.bf16.mxu0 0
        %310 = vmatpush1.bf16.msra.mxu0 0
        %311 = vmatprep.subr.bf16.mxu0 0
        %312 = vmatpush1.bf16.msra.mxu0 0
        %313 = vmatprep.subr.bf16.mxu0 0
        %314 = vmatpush1.bf16.msra.mxu0 0
        %315 = vmatprep.subr.bf16.mxu0 0
        %316 = vmatpush1.bf16.msra.mxu0 0
        %317 = vmatprep.subr.bf16.mxu0 0
        %318 = vmatpush1.bf16.msra.mxu0 0
        %319 = vmatprep.subr.bf16.mxu0 0
        %320 = vmatpush1.bf16.msra.mxu0 0
        %321 = vmatprep.subr.bf16.mxu0 0
        %322 = vmatpush1.bf16.msra.mxu0 0
        %323 = vmatprep.subr.bf16.mxu0 0
        %324 = vmatpush1.bf16.msra.mxu0 0
        %325 = vmatprep.subr.bf16.mxu0 0
        %326 = vmatpush1.bf16.msra.mxu0 0
        %327 = vmatprep.subr.bf16.mxu0 0
        %328 = vmatpush1.bf16.msra.mxu0 0
        %329 = vmatprep.subr.bf16.mxu0 0
        %330 = vmatpush1.bf16.msra.mxu0 0
        %331 = vmatprep.subr.bf16.mxu0 0
        %332 = vmatpush1.bf16.msra.mxu0 0
        %333 = vmatprep.subr.bf16.mxu0 0
        %334 = vmatpush1.bf16.msra.mxu0 0
        %335 = vmatprep.mubr.bf16.mxu0 0
        %336 = vmatmul.mubr.bf16.gmra.mrb[0].mxu0 %v301
        %v337 = vpop.f32.mrb[0].mxu0
        %v338 = vadd.f32 %v285, %v337
        %v339 = vpop.f32.mrb[0].mxu0
        %v340 = vpop.f32.mrb[0].mxu0
        %v341 = vpop.f32.mrb[0].mxu0
        %342 = vdwg.mxu0
        %343 = vst.msk [vmem:[%s258] sm:$0xff] %vm299, %v338
        %345 = vrot.lane.b32.xlu0 %v338, 96
        %v346 = vpop.permute.xlu0 %345
        %348 = vst.msk [vmem:[%s265] sm:$0xff] %vm299, %v346
        %349 = vrot.lane.b32.xlu0 %v338, 64
        %v350 = vpop.permute.xlu0 %349
        %352 = vst.msk [vmem:[%s272] sm:$0xff] %vm299, %v350
        %s353 = sand.u32 %s103, 1
        %s354 = scalar_lea.sflag [#allocation4], %s353
        %s355 = sand.u32 %s103, 1
        %s356 = smul.addr %s355, 8
        %s357 = scalar_lea.vmem [#allocation7], %s356
        %s358 = sand.u32 %s27, 1
        %s359 = scalar_lea.sflag [#allocation9], %s358
        %s360 = sand.u32 %s129, 1
        %s361 = smul.addr %s360, 8
        %s362 = scalar_lea.vmem [#allocation8], %s361
        %s363 = sand.u32 %s27, 1
        %s364 = scalar_lea.sflag [#allocation9], %s363
        %s365 = sand.u32 %s155, 1
        %s366 = smul.addr %s365, 8
        %s367 = scalar_lea.vmem [#allocation10], %s366
        // Predicated region
        $region41: #{tpu_custom_call.1} parent=31 // pred_check
          %p368 = pneg %p113
        $region42: #{tpu_custom_call.1} parent=31 // pred_check_branch
          %370 = sbr.rel (%p368) target = $region44
        $region43: #{tpu_custom_call.1} parent=31 // pred_region
          %s372 = ssub.s32 128, 128
          %373 = vsyncadd %s354, %s372
          %s374 = smul.addr %s27, 128
          %s375 = scalar_lea.hbm %s3, %s374
          %s377 = sshll.u32 %s357, 4
          %s378 = int_to_ptr.vmem [resolvable:$true] %s377
          %380 = dma.vmem_to_hbm [thread:$0]  %s378, 128, %s375, %s354
        $region44: #{tpu_custom_call.1} parent=31 // pred_fallthru
          _
        // Predicated region
        $region45: #{tpu_custom_call.1} parent=31 // pred_check
          %p381 = pneg %p139
        $region46: #{tpu_custom_call.1} parent=31 // pred_check_branch
          %383 = sbr.rel (%p381) target = $region48
        $region47: #{tpu_custom_call.1} parent=31 // pred_region
          %s385 = ssub.s32 128, 128
          %386 = vsyncadd %s359, %s385
          %s387 = smul.addr %s27, 128
          %s388 = scalar_lea.hbm %s4, %s387
          %s390 = sshll.u32 %s362, 4
          %s391 = int_to_ptr.vmem [resolvable:$true] %s390
          %393 = dma.vmem_to_hbm [thread:$0]  %s391, 128, %s388, %s359
        $region48: #{tpu_custom_call.1} parent=31 // pred_fallthru
          _
        // Predicated region
        $region49: #{tpu_custom_call.1} parent=31 // pred_check
          %p394 = pneg %p165
        $region50: #{tpu_custom_call.1} parent=31 // pred_check_branch
          %396 = sbr.rel (%p394) target = $region52
        $region51: #{tpu_custom_call.1} parent=31 // pred_region
          %s398 = ssub.s32 128, 128
          %399 = vsyncadd %s364, %s398
          %s400 = smul.addr %s27, 128
          %s401 = scalar_lea.hbm %s5, %s400
          %s403 = sshll.u32 %s367, 4
          %s404 = int_to_ptr.vmem [resolvable:$true] %s403
          %406 = dma.vmem_to_hbm [thread:$0]  %s404, 128, %s401, %s364
        $region52: #{tpu_custom_call.1} parent=31 // pred_fallthru
          _
      $region32: #{tpu_custom_call.1} parent=5 // pred_fallthru
        _
      %p407 = scmp.le.s32.totalorder 2, %s22
      // Predicated region
      $region53: #{tpu_custom_call.1} parent=5 // pred_check
        %p408 = pneg %p407
      $region54: #{tpu_custom_call.1} parent=5 // pred_check_branch
        %410 = sbr.rel (%p408) target = $region56
      $region55: #{tpu_custom_call.1} parent=5 // pred_region
        %s411 = ssub.s32 %s22, 2
        // Predicated region
        $region57: #{tpu_custom_call.1} parent=55 // pred_check
          %p412 = pneg %p119
        $region58: #{tpu_custom_call.1} parent=55 // pred_check_branch
          %414 = sbr.rel (%p412) target = $region60
        $region59: #{tpu_custom_call.1} parent=55 // pred_region
          %s415 = sand.u32 %s104, 1
          %s416 = scalar_lea.sflag [#allocation4], %s415
          %s417 = sand.u32 %s104, 1
          %s418 = smul.addr %s417, 8
          %s419 = scalar_lea.vmem [#allocation7], %s418
          %420 = dma.done %s416, 128
        $region60: #{tpu_custom_call.1} parent=55 // pred_fallthru
          _
        // Predicated region
        $region61: #{tpu_custom_call.1} parent=55 // pred_check
          %p421 = pneg %p145
        $region62: #{tpu_custom_call.1} parent=55 // pred_check_branch
          %423 = sbr.rel (%p421) target = $region64
        $region63: #{tpu_custom_call.1} parent=55 // pred_region
          %s424 = sand.u32 %s28, 1
          %s425 = scalar_lea.sflag [#allocation9], %s424
          %s426 = sand.u32 %s130, 1
          %s427 = smul.addr %s426, 8
          %s428 = scalar_lea.vmem [#allocation8], %s427
          %429 = dma.done %s425, 128
        $region64: #{tpu_custom_call.1} parent=55 // pred_fallthru
          _
        // Predicated region
        $region65: #{tpu_custom_call.1} parent=55 // pred_check
          %p430 = pneg %p171
        $region66: #{tpu_custom_call.1} parent=55 // pred_check_branch
          %432 = sbr.rel (%p430) target = $region68
        $region67: #{tpu_custom_call.1} parent=55 // pred_region
          %s433 = sand.u32 %s28, 1
          %s434 = scalar_lea.sflag [#allocation9], %s433
          %s435 = sand.u32 %s156, 1
          %s436 = smul.addr %s435, 8
          %s437 = scalar_lea.vmem [#allocation10], %s436
          %438 = dma.done %s434, 128
        $region68: #{tpu_custom_call.1} parent=55 // pred_fallthru
          _
      $region56: #{tpu_custom_call.1} parent=5 // pred_fallthru
        _
    $region6: #{tpu_custom_call.1} parent=1 // loop_footer
      %s26 = sadd.s32 1, %s22
    $region7: #{tpu_custom_call.1} parent=1 // loop_footer_branch
      %21 = sbr.rel target = $region3
    $region8: #{tpu_custom_call.1} parent=1 // loop_exit
      _
    %439 = vsyncpa [#allocation3], 1
    %s440 = scalar_lea.sflag [#allocation3], 1
    %441 = vsyncpa %s440, 1
    %442 = vsyncpa [#allocation6], 1
    %443 = vsyncpa [#allocation4], 1
    %s444 = scalar_lea.sflag [#allocation4], 1
    %445 = vsyncpa %s444, 1
    %446 = vsyncpa [#allocation9], 1
    %s447 = scalar_lea.sflag [#allocation9], 1
    %448 = vsyncpa %s447, 1

</llo_original>
